<compile_context>
chip_gen: v6e
topology: v6e:2x2x1
jax: 0.10.0
libtpu: 0.0.40
codegen_flags: <defaults>
</compile_context>

<pallas_src>
import jax
import jax.numpy as jnp
import numpy as np
from jax.experimental import pallas as pl
from jax.experimental.pallas import tpu as pltpu


# ----------------------------- Pallas kernel ------------------------------- #
def _double_conv_kernel(x_ref, w1_ref, t1_ref, w2_ref, t2_ref, o_ref):
    # x_ref:  (NB, Cin, L)     input block, NCL, compute dtype (bf16 or f32)
    # w1_ref: (Cout, 3*Cin)    conv1 weights (tap-major columns), BN1 scale folded in
    # t1_ref: (Cout, 1)        folded (bias + BN1) shift, f32
    # w2_ref: (Cout, 3*Cout)   conv2 weights, BN2 scale folded in
    # t2_ref: (Cout, 1)        folded shift, f32
    # o_ref:  (NB, Cout, L)    output block, NCL, f32
    nb = x_ref.shape[0]
    cdt = w1_ref.dtype                       # MXU compute dtype

    w1 = w1_ref[...]
    w2 = w2_ref[...]
    t1 = t1_ref[...]                         # (Cout, 1) f32
    t2 = t2_ref[...]

    def im2col_k3(a):
        # a: (C, L) f32 -> (3*C, L); rows ordered [tap0 | tap1 | tap2],
        # tap0 reads a[:, l-1], tap1 a[:, l], tap2 a[:, l+1], zero at the ends.
        c = a.shape[0]
        z = jnp.zeros((c, 1), a.dtype)
        left = jnp.concatenate([z, a[:, :-1]], axis=1)    # shifted right
        right = jnp.concatenate([a[:, 1:], z], axis=1)    # shifted left
        return jnp.concatenate([left, a, right], axis=0)

    for b in range(nb):                      # static unroll over the small batch block
        x = x_ref[b].astype(jnp.float32)     # (Cin, L); layout ops in f32 (lossless)
        xcol = im2col_k3(x).astype(cdt)      # (3*Cin, L)
        # conv1 + BN1 + ReLU: single MXU matmul, f32 accumulation, f32 epilogue
        h = jnp.dot(w1, xcol, preferred_element_type=jnp.float32)   # (Cout, L)
        h = jnp.maximum(h + t1, 0.0)

        hcol = im2col_k3(h).astype(cdt)      # (3*Cout, L)
        # conv2 + BN2 + ReLU
        y = jnp.dot(w2, hcol, preferred_element_type=jnp.float32)   # (Cout, L)
        y = jnp.maximum(y + t2, 0.0)
        o_ref[b] = y.astype(o_ref.dtype)


def double_conv1d_pallas(x_ncl, w1k, t1, w2k, t2, *,
                         compute_dtype=jnp.float32, batch_block=8):
    """x_ncl: (N, Cin, L) NCL -> (N, Cout, L) NCL (DoubleConv1d, inference BN)."""
    N, Cin, L = x_ncl.shape
    Cout = w1k.shape[0]

    nb = min(N, batch_block)                 # batch elements per grid step
    while N % nb:                            # keep blocks uniform
        nb -= 1
    grid = (N // nb,)

    x_in = x_ncl.astype(compute_dtype)
    w1_in = w1k.astype(compute_dtype)
    w2_in = w2k.astype(compute_dtype)
    t1_in = t1.reshape(Cout, 1).astype(jnp.float32)
    t2_in = t2.reshape(Cout, 1).astype(jnp.float32)

    return pl.pallas_call(
        _double_conv_kernel,
        out_shape=jax.ShapeDtypeStruct((N, Cout, L), jnp.float32),
        grid_spec=pltpu.PrefetchScalarGridSpec(
            num_scalar_prefetch=0,
            grid=grid,
            in_specs=[
                pl.BlockSpec((nb, Cin, L), lambda i: (i, 0, 0)),
                pl.BlockSpec((Cout, 3 * Cin), lambda i: (0, 0)),
                pl.BlockSpec((Cout, 1), lambda i: (0, 0)),
                pl.BlockSpec((Cout, 3 * Cout), lambda i: (0, 0)),
                pl.BlockSpec((Cout, 1), lambda i: (0, 0)),
            ],
            out_specs=pl.BlockSpec((nb, Cout, L), lambda i: (i, 0, 0)),
        ),
        compiler_params=pltpu.CompilerParams(
            dimension_semantics=("parallel",),      # shard batch blocks on v7x's 2 TCs
            vmem_limit_bytes=32 * 1024 * 1024),
    )(x_in, w1_in, t1_in, w2_in, t2_in)


# ------------------------------- JAX glue ---------------------------------- #
def linear_interp_x2_align_corners(x):
    """F.interpolate(x, scale_factor=2, mode='linear', align_corners=True)."""
    N, C, Lin = x.shape
    Lout = 2 * Lin
    if Lin == 1:
        return jnp.repeat(x, Lout, axis=-1)
    src = jnp.arange(Lout, dtype=jnp.float32) * (Lin - 1) / (Lout - 1)
    i0 = jnp.clip(jnp.floor(src).astype(jnp.int32), 0, Lin - 1)
    i1 = jnp.clip(i0 + 1, 0, Lin - 1)
    w = src - i0.astype(jnp.float32)
    x0 = jnp.take(x, i0, axis=-1)
    x1 = jnp.take(x, i1, axis=-1)
    return x0 * (1.0 - w) + x1 * w


def _fold_conv_bn(w, b, g, beta, m, v, eps=1e-5):
    """Fold inference BN into conv: returns (Cout, 3*Cin) weights and (Cout,) shift.

    Weight columns are ordered tap-major (col = tap*Cin + cin) to match the
    kernel's im2col row ordering [tap0 | tap1 | tap2].
    """
    s = g / jnp.sqrt(v + eps)                           # (Cout,)
    shift = (b - m) * s + beta                          # (Cout,)
    wf = w * s[:, None, None]                           # (Cout, Cin, 3), scale folded
    cout, cin, k = wf.shape
    wk = jnp.transpose(wf, (0, 2, 1)).reshape(cout, k * cin)
    return wk, shift


def up1d_forward(x1, x2, params, use_bf16=True):
    """Up1d(bilinear=True).forward(x1, x2); x1:(N,C1,L1), x2:(N,C2,L2) NCL -> NCL."""
    x1u = linear_interp_x2_align_corners(x1)
    diff = x2.shape[2] - x1u.shape[2]
    x1u = jnp.pad(x1u, ((0, 0), (0, 0), (diff // 2, diff - diff // 2)))
    x = jnp.concatenate([x2, x1u], axis=1)              # (N, Cin, L) — kernel-native NCL

    w1k, t1 = _fold_conv_bn(*params["conv1"])
    w2k, t2 = _fold_conv_bn(*params["conv2"])
    cdt = jnp.bfloat16 if use_bf16 else jnp.float32
    return double_conv1d_pallas(x, w1k, t1, w2k, t2, compute_dtype=cdt)


def reference_forward(x1, x2, params, eps=1e-5):
    """Pure-JAX (lax.conv) f32 reference for validation."""
    x1u = linear_interp_x2_align_corners(x1)
    diff = x2.shape[2] - x1u.shape[2]
    x1u = jnp.pad(x1u, ((0, 0), (0, 0), (diff // 2, diff - diff // 2)))
    x = jnp.concatenate([x2, x1u], axis=1)

    def conv_bn_relu(x, w, b, g, beta, m, v):
        y = jax.lax.conv_general_dilated(
            x, w, window_strides=(1,), padding=[(1, 1)],
            dimension_numbers=("NCH", "OIH", "NCH"))
        y = y + b[None, :, None]
        y = (y - m[None, :, None]) / jnp.sqrt(v[None, :, None] + eps)
        y = y * g[None, :, None] + beta[None, :, None]
        return jnp.maximum(y, 0.0)

    y = conv_bn_relu(x, *params["conv1"])
    y = conv_bn_relu(y, *params["conv2"])
    return y


# --------------------------------- main ------------------------------------ #
if __name__ == "__main__":
    key = jax.random.PRNGKey(0)
    N = 2
    in_channels = 8          # channels after concat = C1 + C2
    out_channels = 8
    C1, C2 = in_channels // 2, in_channels // 2
    L1 = 7                   # x1 length (deep feature) -> upsampled to 14
    L2 = 16                  # x2 length (skip feature); diff = 2 exercises F.pad

    keys = jax.random.split(key, 14)
    x1 = jax.random.normal(keys[0], (N, C1, L1), jnp.float32)
    x2 = jax.random.normal(keys[1], (N, C2, L2), jnp.float32)

    def conv_bn_params(kw, kb, kg, kbeta, km, kv, cin, cout):
        w = 0.1 * jax.random.normal(kw, (cout, cin, 3), jnp.float32)
        b = 0.1 * jax.random.normal(kb, (cout,), jnp.float32)
        g = 1.0 + 0.1 * jax.random.normal(kg, (cout,), jnp.float32)
        beta = 0.1 * jax.random.normal(kbeta, (cout,), jnp.float32)
        m = 0.1 * jax.random.normal(km, (cout,), jnp.float32)
        v = jnp.abs(jax.random.normal(kv, (cout,), jnp.float32)) + 0.5
        return (w, b, g, beta, m, v)

    params = {
        "conv1": conv_bn_params(*keys[2:8], in_channels, out_channels),
        "conv2": conv_bn_params(*keys[8:14], out_channels, out_channels),
    }

    ref = reference_forward(x1, x2, params)

    # Strict structural check: f32 matmul inputs.
    out_f32 = jax.block_until_ready(up1d_forward(x1, x2, params, use_bf16=False))
    np.testing.assert_allclose(np.asarray(out_f32), np.asarray(ref),
                               rtol=1e-4, atol=1e-4)

    # Production path: bf16 MXU inputs, f32 accumulation + epilogue.
    out_bf16 = jax.block_until_ready(up1d_forward(x1, x2, params, use_bf16=True))
    np.testing.assert_allclose(np.asarray(out_bf16), np.asarray(ref),
                               rtol=5e-2, atol=5e-2)

    print("KERNEL_OK")
</pallas_src>

<mosaic_0001>
module attributes {stable_mosaic.version = 11 : i64} {
  func.func @_double_conv_kernel(%arg0: i32, %arg1: memref<2x8x16xf32, #tpu.memory_space<vmem>>, %arg2: memref<8x24xf32, #tpu.memory_space<vmem>>, %arg3: memref<8x1xf32, #tpu.memory_space<vmem>>, %arg4: memref<8x24xf32, #tpu.memory_space<vmem>>, %arg5: memref<8x1xf32, #tpu.memory_space<vmem>>, %arg6: memref<2x8x16xf32, #tpu.memory_space<vmem>>) attributes {dimension_semantics = [#tpu.dimension_semantics<parallel>], iteration_bounds = array<i64: 1>, scalar_prefetch = 0 : i64, scratch_operands = 0 : i64, tpu.core_type = #tpu.core_type<tc>, window_params = [{transform_indices = @transform_0, window_bounds = array<i64: 2, 8, 16>}, {pipeline_mode = #tpu.pipeline_mode<synchronous>, transform_indices = @transform_1, window_bounds = array<i64: 8, 24>}, {pipeline_mode = #tpu.pipeline_mode<synchronous>, transform_indices = @transform_2, window_bounds = array<i64: 8, 1>}, {pipeline_mode = #tpu.pipeline_mode<synchronous>, transform_indices = @transform_3, window_bounds = array<i64: 8, 24>}, {pipeline_mode = #tpu.pipeline_mode<synchronous>, transform_indices = @transform_4, window_bounds = array<i64: 8, 1>}, {transform_indices = @transform_5, window_bounds = array<i64: 2, 8, 16>}]} {
    %c0 = arith.constant 0 : index
    %c0_0 = arith.constant 0 : index
    %0 = vector.load %arg2[%c0, %c0_0] : memref<8x24xf32, #tpu.memory_space<vmem>>, vector<8x24xf32>
    %c0_1 = arith.constant 0 : index
    %c0_2 = arith.constant 0 : index
    %1 = vector.load %arg4[%c0_1, %c0_2] : memref<8x24xf32, #tpu.memory_space<vmem>>, vector<8x24xf32>
    %c0_3 = arith.constant 0 : index
    %c0_4 = arith.constant 0 : index
    %2 = vector.load %arg3[%c0_3, %c0_4] : memref<8x1xf32, #tpu.memory_space<vmem>>, vector<8x1xf32>
    %c0_5 = arith.constant 0 : index
    %c0_6 = arith.constant 0 : index
    %3 = vector.load %arg5[%c0_5, %c0_6] : memref<8x1xf32, #tpu.memory_space<vmem>>, vector<8x1xf32>
    %c0_7 = arith.constant 0 : index
    %c0_8 = arith.constant 0 : index
    %c0_9 = arith.constant 0 : index
    %4 = vector.load %arg1[%c0_7, %c0_8, %c0_9] : memref<2x8x16xf32, #tpu.memory_space<vmem>>, vector<1x8x16xf32>
    %5 = vector.shape_cast %4 : vector<1x8x16xf32> to vector<8x16xf32>
    %cst = arith.constant 0.000000e+00 : f32
    %6 = vector.broadcast %cst : f32 to vector<8x1xf32>
    %7 = vector.extract_strided_slice %5 {offsets = [0, 0], sizes = [8, 15], strides = [1, 1]} : vector<8x16xf32> to vector<8x15xf32>
    %8 = tpu.concatenate %6, %7 in 1 : vector<8x1xf32>, vector<8x15xf32> -> vector<8x16xf32>
    %9 = vector.extract_strided_slice %5 {offsets = [0, 1], sizes = [8, 15], strides = [1, 1]} : vector<8x16xf32> to vector<8x15xf32>
    %10 = tpu.concatenate %9, %6 in 1 : vector<8x15xf32>, vector<8x1xf32> -> vector<8x16xf32>
    %11 = tpu.concatenate %8, %5, %10 in 0 : vector<8x16xf32>, vector<8x16xf32>, vector<8x16xf32> -> vector<24x16xf32>
    %cst_10 = arith.constant dense<0.000000e+00> : vector<8x16xf32>
    %12 = tpu.matmul %0, %11, %cst_10 {dimension_numbers = #tpu.dot_dimension_numbers<[1], [0], [0], [1], [0, 0, 1, 1], [], []>} : vector<8x24xf32>, vector<24x16xf32>, vector<8x16xf32> -> vector<8x16xf32>
    %13 = vector.broadcast %2 : vector<8x1xf32> to vector<8x16xf32>
    %14 = arith.addf %12, %13 : vector<8x16xf32>
    %cst_11 = arith.constant 0.000000e+00 : f32
    %15 = vector.broadcast %cst_11 : f32 to vector<8x16xf32>
    %16 = arith.maximumf %14, %15 : vector<8x16xf32>
    %cst_12 = arith.constant 0.000000e+00 : f32
    %17 = vector.broadcast %cst_12 : f32 to vector<8x1xf32>
    %18 = vector.extract_strided_slice %16 {offsets = [0, 0], sizes = [8, 15], strides = [1, 1]} : vector<8x16xf32> to vector<8x15xf32>
    %19 = tpu.concatenate %17, %18 in 1 : vector<8x1xf32>, vector<8x15xf32> -> vector<8x16xf32>
    %20 = vector.extract_strided_slice %16 {offsets = [0, 1], sizes = [8, 15], strides = [1, 1]} : vector<8x16xf32> to vector<8x15xf32>
    %21 = tpu.concatenate %20, %17 in 1 : vector<8x15xf32>, vector<8x1xf32> -> vector<8x16xf32>
    %22 = tpu.concatenate %19, %16, %21 in 0 : vector<8x16xf32>, vector<8x16xf32>, vector<8x16xf32> -> vector<24x16xf32>
    %cst_13 = arith.constant dense<0.000000e+00> : vector<8x16xf32>
    %23 = tpu.matmul %1, %22, %cst_13 {dimension_numbers = #tpu.dot_dimension_numbers<[1], [0], [0], [1], [0, 0, 1, 1], [], []>} : vector<8x24xf32>, vector<24x16xf32>, vector<8x16xf32> -> vector<8x16xf32>
    %24 = vector.broadcast %3 : vector<8x1xf32> to vector<8x16xf32>
    %25 = arith.addf %23, %24 : vector<8x16xf32>
    %cst_14 = arith.constant 0.000000e+00 : f32
    %26 = vector.broadcast %cst_14 : f32 to vector<8x16xf32>
    %27 = arith.maximumf %25, %26 : vector<8x16xf32>
    %c0_15 = arith.constant 0 : index
    %c0_16 = arith.constant 0 : index
    %c0_17 = arith.constant 0 : index
    %28 = vector.load %arg6[%c0_15, %c0_16, %c0_17] : memref<2x8x16xf32, #tpu.memory_space<vmem>>, vector<1x8x16xf32>
    %29 = vector.shape_cast %28 : vector<1x8x16xf32> to vector<8x16xf32>
    %30 = vector.shape_cast %27 : vector<8x16xf32> to vector<1x8x16xf32>
    tpu.vector_store %arg6[%c0_15, %c0_16, %c0_17], %30 {strides = array<i32>} : memref<2x8x16xf32, #tpu.memory_space<vmem>>, vector<1x8x16xf32>,
    %c1 = arith.constant 1 : index
    %c0_18 = arith.constant 0 : index
    %c0_19 = arith.constant 0 : index
    %31 = vector.load %arg1[%c1, %c0_18, %c0_19] : memref<2x8x16xf32, #tpu.memory_space<vmem>>, vector<1x8x16xf32>
    %32 = vector.shape_cast %31 : vector<1x8x16xf32> to vector<8x16xf32>
    %cst_20 = arith.constant 0.000000e+00 : f32
    %33 = vector.broadcast %cst_20 : f32 to vector<8x1xf32>
    %34 = vector.extract_strided_slice %32 {offsets = [0, 0], sizes = [8, 15], strides = [1, 1]} : vector<8x16xf32> to vector<8x15xf32>
    %35 = tpu.concatenate %33, %34 in 1 : vector<8x1xf32>, vector<8x15xf32> -> vector<8x16xf32>
    %36 = vector.extract_strided_slice %32 {offsets = [0, 1], sizes = [8, 15], strides = [1, 1]} : vector<8x16xf32> to vector<8x15xf32>
    %37 = tpu.concatenate %36, %33 in 1 : vector<8x15xf32>, vector<8x1xf32> -> vector<8x16xf32>
    %38 = tpu.concatenate %35, %32, %37 in 0 : vector<8x16xf32>, vector<8x16xf32>, vector<8x16xf32> -> vector<24x16xf32>
    %cst_21 = arith.constant dense<0.000000e+00> : vector<8x16xf32>
    %39 = tpu.matmul %0, %38, %cst_21 {dimension_numbers = #tpu.dot_dimension_numbers<[1], [0], [0], [1], [0, 0, 1, 1], [], []>} : vector<8x24xf32>, vector<24x16xf32>, vector<8x16xf32> -> vector<8x16xf32>
    %40 = vector.broadcast %2 : vector<8x1xf32> to vector<8x16xf32>
    %41 = arith.addf %39, %40 : vector<8x16xf32>
    %cst_22 = arith.constant 0.000000e+00 : f32
    %42 = vector.broadcast %cst_22 : f32 to vector<8x16xf32>
    %43 = arith.maximumf %41, %42 : vector<8x16xf32>
    %cst_23 = arith.constant 0.000000e+00 : f32
    %44 = vector.broadcast %cst_23 : f32 to vector<8x1xf32>
    %45 = vector.extract_strided_slice %43 {offsets = [0, 0], sizes = [8, 15], strides = [1, 1]} : vector<8x16xf32> to vector<8x15xf32>
    %46 = tpu.concatenate %44, %45 in 1 : vector<8x1xf32>, vector<8x15xf32> -> vector<8x16xf32>
    %47 = vector.extract_strided_slice %43 {offsets = [0, 1], sizes = [8, 15], strides = [1, 1]} : vector<8x16xf32> to vector<8x15xf32>
    %48 = tpu.concatenate %47, %44 in 1 : vector<8x15xf32>, vector<8x1xf32> -> vector<8x16xf32>
    %49 = tpu.concatenate %46, %43, %48 in 0 : vector<8x16xf32>, vector<8x16xf32>, vector<8x16xf32> -> vector<24x16xf32>
    %cst_24 = arith.constant dense<0.000000e+00> : vector<8x16xf32>
    %50 = tpu.matmul %1, %49, %cst_24 {dimension_numbers = #tpu.dot_dimension_numbers<[1], [0], [0], [1], [0, 0, 1, 1], [], []>} : vector<8x24xf32>, vector<24x16xf32>, vector<8x16xf32> -> vector<8x16xf32>
    %51 = vector.broadcast %3 : vector<8x1xf32> to vector<8x16xf32>
    %52 = arith.addf %50, %51 : vector<8x16xf32>
    %cst_25 = arith.constant 0.000000e+00 : f32
    %53 = vector.broadcast %cst_25 : f32 to vector<8x16xf32>
    %54 = arith.maximumf %52, %53 : vector<8x16xf32>
    %c1_26 = arith.constant 1 : index
    %c0_27 = arith.constant 0 : index
    %c0_28 = arith.constant 0 : index
    %55 = vector.load %arg6[%c1_26, %c0_27, %c0_28] : memref<2x8x16xf32, #tpu.memory_space<vmem>>, vector<1x8x16xf32>
    %56 = vector.shape_cast %55 : vector<1x8x16xf32> to vector<8x16xf32>
    %57 = vector.shape_cast %54 : vector<8x16xf32> to vector<1x8x16xf32>
    tpu.vector_store %arg6[%c1_26, %c0_27, %c0_28], %57 {strides = array<i32>} : memref<2x8x16xf32, #tpu.memory_space<vmem>>, vector<1x8x16xf32>,
    return
  }
  func.func @transform_0(%arg0: i32) -> (i32, i32, i32) {
    %c0_i32 = arith.constant 0 : i32
    %c0_i32_0 = arith.constant 0 : i32
    %c0_i32_1 = arith.constant 0 : i32
    return %arg0, %c0_i32, %c0_i32_0 : i32, i32, i32
  }
  func.func @transform_1(%arg0: i32) -> (i32, i32) {
    %c0_i32 = arith.constant 0 : i32
    %c0_i32_0 = arith.constant 0 : i32
    %c0_i32_1 = arith.constant 0 : i32
    return %c0_i32, %c0_i32_0 : i32, i32
  }
  func.func @transform_2(%arg0: i32) -> (i32, i32) {
    %c0_i32 = arith.constant 0 : i32
    %c0_i32_0 = arith.constant 0 : i32
    %c0_i32_1 = arith.constant 0 : i32
    return %c0_i32, %c0_i32_0 : i32, i32
  }
  func.func @transform_3(%arg0: i32) -> (i32, i32) {
    %c0_i32 = arith.constant 0 : i32
    %c0_i32_0 = arith.constant 0 : i32
    %c0_i32_1 = arith.constant 0 : i32
    return %c0_i32, %c0_i32_0 : i32, i32
  }
  func.func @transform_4(%arg0: i32) -> (i32, i32) {
    %c0_i32 = arith.constant 0 : i32
    %c0_i32_0 = arith.constant 0 : i32
    %c0_i32_1 = arith.constant 0 : i32
    return %c0_i32, %c0_i32_0 : i32, i32
  }
  func.func @transform_5(%arg0: i32) -> (i32, i32, i32) {
    %c0_i32 = arith.constant 0 : i32
    %c0_i32_0 = arith.constant 0 : i32
    %c0_i32_1 = arith.constant 0 : i32
    return %arg0, %c0_i32, %c0_i32_0 : i32, i32, i32
  }
}

</mosaic_0001>

<llo_original>
// kernel: tpu_custom_call.1
$region0: #{tpu_custom_call.1}
  #allocation0 [shape = 'u32[]', space=smem, size = 0x4, offset = 0x4, fixed_abs, tag = 'smem constant byte address 0x4 - core index']
  #allocation1 [shape = 'u32[144,128]{1,0:T(1,128)}', space=vmem, size = 0x12000, scoped, tag = 'internal scratch']
  %s0 = inlined_call_operand.vmem [shape: f32[2,8,16], index: 0, kind: input, shape index: {}]
  %s1 = inlined_call_operand.hbm [shape: f32[8,24], index: 1, kind: input, shape index: {}]
  %s2 = inlined_call_operand.vmem [shape: f32[8,1], index: 2, kind: input, shape index: {}]
  %s3 = inlined_call_operand.hbm [shape: f32[8,24], index: 3, kind: input, shape index: {}]
  %s4 = inlined_call_operand.vmem [shape: f32[8,1], index: 4, kind: input, shape index: {}]
  %s5 = inlined_call_operand.hbm [shape: f32[2,8,16], index: 5, kind: output, shape index: {}]
  %s6 = sld [smem:[#allocation0]]
  $region38: #{tpu_custom_call.1} parent=0
    _
  %s8 = ssub.s32 1, %s6
  %s9 = scalar_select 0, %s8, %s6
  $region1: #{tpu_custom_call.1} parent=0
    #allocation2 [shape = 'u8[4096]{0}', space=vmem, size = 0x1000, scoped, tag = 'input window, operand 1, single buffered']
    #allocation3 [shape = 's32[1]{0}', space=sflag, size = 0x4, scoped, tag = 'scoped memory for tpu_custom_call.1']
    #allocation4 [shape = 's32[1]{0}', space=sflag, size = 0x4, scoped, tag = 'scoped memory for tpu_custom_call.1']
    #allocation5 [shape = 'u8[4096]{0}', space=vmem, size = 0x1000, scoped, tag = 'input window, operand 3, single buffered']
    #allocation6 [shape = 's32[1]{0}', space=sflag, size = 0x4, scoped, tag = 'scoped memory for tpu_custom_call.1']
    #allocation7 [shape = 'u8[8192]{0}', space=vmem, size = 0x2000, scoped, tag = 'output window, operand 0, single buffered']
    %10 = vsyncpa [#allocation3], 0
    %11 = vsyncpa [#allocation6], 0
    %12 = vsyncpa [#allocation4], 0
    // Predicated region
    $region2: #{tpu_custom_call.1} parent=1 // pred_check
      _
    $region3: #{tpu_custom_call.1} parent=1 // pred_check_branch
      %14 = sbr.rel (0) target = $region5
    $region4: #{tpu_custom_call.1} parent=1 // pred_region
      _
    $region5: #{tpu_custom_call.1} parent=1 // pred_fallthru
      _
    // Predicated region
    $region6: #{tpu_custom_call.1} parent=1 // pred_check
      _
    $region7: #{tpu_custom_call.1} parent=1 // pred_check_branch
      %16 = sbr.rel (0) target = $region9
    $region8: #{tpu_custom_call.1} parent=1 // pred_region
      %s18 = ssub.s32 128, 128
      %19 = vsyncadd [#allocation3], %s18
      %s21 = sshll.u32 [#allocation2], 4
      %s22 = int_to_ptr.vmem [resolvable:$true] %s21
      %24 = dma.hbm_to_vmem [thread:$0]  %s1, 128, %s22, [#allocation3]
    $region9: #{tpu_custom_call.1} parent=1 // pred_fallthru
      _
    // Predicated region
    $region10: #{tpu_custom_call.1} parent=1 // pred_check
      _
    $region11: #{tpu_custom_call.1} parent=1 // pred_check_branch
      %26 = sbr.rel (0) target = $region13
    $region12: #{tpu_custom_call.1} parent=1 // pred_region
      _
    $region13: #{tpu_custom_call.1} parent=1 // pred_fallthru
      _
    // Predicated region
    $region14: #{tpu_custom_call.1} parent=1 // pred_check
      _
    $region15: #{tpu_custom_call.1} parent=1 // pred_check_branch
      %28 = sbr.rel (0) target = $region17
    $region16: #{tpu_custom_call.1} parent=1 // pred_region
      %s30 = ssub.s32 128, 128
      %31 = vsyncadd [#allocation6], %s30
      %s33 = sshll.u32 [#allocation5], 4
      %s34 = int_to_ptr.vmem [resolvable:$true] %s33
      %36 = dma.hbm_to_vmem [thread:$0]  %s3, 128, %s34, [#allocation6]
    $region17: #{tpu_custom_call.1} parent=1 // pred_fallthru
      _
    // Predicated region
    $region18: #{tpu_custom_call.1} parent=1 // pred_check
      _
    $region19: #{tpu_custom_call.1} parent=1 // pred_check_branch
      %38 = sbr.rel (0) target = $region21
    $region20: #{tpu_custom_call.1} parent=1 // pred_region
      _
    $region21: #{tpu_custom_call.1} parent=1 // pred_fallthru
      _
    // Predicated region
    $region22: #{tpu_custom_call.1} parent=1 // pred_check
      _
    $region23: #{tpu_custom_call.1} parent=1 // pred_check_branch
      %40 = sbr.rel (0) target = $region25
    $region24: #{tpu_custom_call.1} parent=1 // pred_region
      %41 = dma.done [#allocation3], 128
    $region25: #{tpu_custom_call.1} parent=1 // pred_fallthru
      _
    // Predicated region
    $region26: #{tpu_custom_call.1} parent=1 // pred_check
      _
    $region27: #{tpu_custom_call.1} parent=1 // pred_check_branch
      %43 = sbr.rel (0) target = $region29
    $region28: #{tpu_custom_call.1} parent=1 // pred_region
      %44 = dma.done [#allocation6], 128
    $region29: #{tpu_custom_call.1} parent=1 // pred_fallthru
      _
    %v45 = vld [vmem:[#allocation2] sm:$0xff]
    %v46 = vld [vmem:[#allocation5] sm:$0xff]
    %v47 = vld [vmem:[%s2] sm:$0xff]
    %v48 = vld [vmem:[%s4] sm:$0xff]
    %v49 = vld [vmem:[%s0] sm:$0xff]
    %51 = vrot.lane.b32.xlu0 %v49, 1
    %v52 = vpop.permute.xlu0 %51
    %vm54 = vcmask 7168
    %v55 = vsel %vm54, 0.0, %v52
    %56 = vrot.lane.b32.xlu0 %v49, 127
    %v57 = vpop.permute.xlu0 %56
    %vm59 = vcmask 121856
    %v60 = vsel %vm59, %v57, 0.0
    %62 = vset.pattern.permute.xlu0 0
    %63 = vperm.xlu0 %62, %v47
    %v64 = vpop.permute.xlu0 %63
    %vm66 = vcmask 195584
    %v68 = vsel %vm66, %v45, 0
    %70 = vmatprep.subr.mxu0 0.0
    %71 = vmatpush1.msra.mxu0 0.0
    %72 = vmatprep.subr.mxu0 0.0
    %73 = vmatpush1.msra.mxu0 0.0
    %74 = vmatprep.subr.mxu0 0.0
    %75 = vmatpush1.msra.mxu0 0.0
    %76 = vmatprep.subr.mxu0 0.0
    %77 = vmatpush1.msra.mxu0 0.0
    %78 = vmatprep.subr.mxu0 0.0
    %79 = vmatpush1.msra.mxu0 0.0
    %80 = vmatprep.subr.mxu0 0.0
    %81 = vmatpush1.msra.mxu0 0.0
    %82 = vmatprep.subr.mxu0 0.0
    %83 = vmatpush1.msra.mxu0 0.0
    %84 = vmatprep.subr.mxu0 0.0
    %85 = vmatpush1.msra.mxu0 0.0
    %86 = vmatprep.subr.mxu0 0.0
    %87 = vmatpush1.msra.mxu0 0.0
    %88 = vmatprep.subr.mxu0 0.0
    %89 = vmatpush1.msra.mxu0 0.0
    %90 = vmatprep.subr.mxu0 0.0
    %91 = vmatpush1.msra.mxu0 0.0
    %92 = vmatprep.subr.mxu0 0.0
    %93 = vmatpush1.msra.mxu0 0.0
    %94 = vmatprep.subr.mxu0 0.0
    %95 = vmatpush1.msra.mxu0 0.0
    %96 = vmatprep.subr.mxu0 0.0
    %97 = vmatpush1.msra.mxu0 %v60
    %98 = vmatprep.subr.mxu0 0.0
    %99 = vmatpush1.msra.mxu0 %v49
    %100 = vmatprep.subr.mxu0 0.0
    %101 = vmatpush1.msra.mxu0 %v55
    %102 = vmatprep.subr.mxu0 0.0
    %103 = vmatpush2.msra.mxu0 0.0
    %104 = vmatprep.subr.mxu0 0.0
    %105 = vmatpush2.msra.mxu0 0.0
    %106 = vmatprep.subr.mxu0 0.0
    %107 = vmatpush2.msra.mxu0 0.0
    %108 = vmatprep.subr.mxu0 0.0
    %109 = vmatpush2.msra.mxu0 0.0
    %110 = vmatprep.subr.mxu0 0.0
    %111 = vmatpush2.msra.mxu0 0.0
    %112 = vmatprep.subr.mxu0 0.0
    %113 = vmatpush2.msra.mxu0 0.0
    %114 = vmatprep.subr.mxu0 0.0
    %115 = vmatpush2.msra.mxu0 0.0
    %116 = vmatprep.subr.mxu0 0.0
    %117 = vmatpush2.msra.mxu0 0.0
    %118 = vmatprep.subr.mxu0 0.0
    %119 = vmatpush2.msra.mxu0 0.0
    %120 = vmatprep.subr.mxu0 0.0
    %121 = vmatpush2.msra.mxu0 0.0
    %122 = vmatprep.subr.mxu0 0.0
    %123 = vmatpush2.msra.mxu0 0.0
    %124 = vmatprep.subr.mxu0 0.0
    %125 = vmatpush2.msra.mxu0 0.0
    %126 = vmatprep.subr.mxu0 0.0
    %127 = vmatpush2.msra.mxu0 0.0
    %128 = vmatprep.subr.mxu0 0.0
    %129 = vmatpush2.msra.mxu0 0.0
    %130 = vmatprep.subr.mxu0 0.0
    %131 = vmatpush2.msra.mxu0 0.0
    %132 = vmatprep.subr.mxu0 0.0
    %133 = vmatpush2.msra.mxu0 0.0
    %134 = vmatprep.mubr.f32.mxu0 0.0
    %135 = vmatmul.mubr.f32.gmra.mxu0 %v68
    %v136 = vpop.f32.mrf.mxu0
    %v137 = vadd.f32 %v64, %v136
    %v138 = vpop.f32.mrf.mxu0
    %139 = vdwg.mxu0
    %v140 = vmax.f32 %v137, 0.0
    %142 = vrot.lane.b32.xlu0 %v140, 1
    %v143 = vpop.permute.xlu0 %142
    %v145 = vsel %vm54, 0.0, %v143
    %146 = vrot.lane.b32.xlu0 %v140, 127
    %v147 = vpop.permute.xlu0 %146
    %v149 = vsel %vm59, %v147, 0.0
    %151 = vset.pattern.permute.xlu0 0
    %152 = vperm.xlu0 %151, %v48
    %v153 = vpop.permute.xlu0 %152
    %v156 = vsel %vm66, %v46, 0
    %158 = vmatprep.subr.mxu0 0.0
    %159 = vmatpush1.msra.mxu0 0.0
    %160 = vmatprep.subr.mxu0 0.0
    %161 = vmatpush1.msra.mxu0 0.0
    %162 = vmatprep.subr.mxu0 0.0
    %163 = vmatpush1.msra.mxu0 0.0
    %164 = vmatprep.subr.mxu0 0.0
    %165 = vmatpush1.msra.mxu0 0.0
    %166 = vmatprep.subr.mxu0 0.0
    %167 = vmatpush1.msra.mxu0 0.0
    %168 = vmatprep.subr.mxu0 0.0
    %169 = vmatpush1.msra.mxu0 0.0
    %170 = vmatprep.subr.mxu0 0.0
    %171 = vmatpush1.msra.mxu0 0.0
    %172 = vmatprep.subr.mxu0 0.0
    %173 = vmatpush1.msra.mxu0 0.0
    %174 = vmatprep.subr.mxu0 0.0
    %175 = vmatpush1.msra.mxu0 0.0
    %176 = vmatprep.subr.mxu0 0.0
    %177 = vmatpush1.msra.mxu0 0.0
    %178 = vmatprep.subr.mxu0 0.0
    %179 = vmatpush1.msra.mxu0 0.0
    %180 = vmatprep.subr.mxu0 0.0
    %181 = vmatpush1.msra.mxu0 0.0
    %182 = vmatprep.subr.mxu0 0.0
    %183 = vmatpush1.msra.mxu0 0.0
    %184 = vmatprep.subr.mxu0 0.0
    %185 = vmatpush1.msra.mxu0 %v149
    %186 = vmatprep.subr.mxu0 0.0
    %187 = vmatpush1.msra.mxu0 %v140
    %188 = vmatprep.subr.mxu0 0.0
    %189 = vmatpush1.msra.mxu0 %v145
    %190 = vmatprep.subr.mxu0 0.0
    %191 = vmatpush2.msra.mxu0 0.0
    %192 = vmatprep.subr.mxu0 0.0
    %193 = vmatpush2.msra.mxu0 0.0
    %194 = vmatprep.subr.mxu0 0.0
    %195 = vmatpush2.msra.mxu0 0.0
    %196 = vmatprep.subr.mxu0 0.0
    %197 = vmatpush2.msra.mxu0 0.0
    %198 = vmatprep.subr.mxu0 0.0
    %199 = vmatpush2.msra.mxu0 0.0
    %200 = vmatprep.subr.mxu0 0.0
    %201 = vmatpush2.msra.mxu0 0.0
    %202 = vmatprep.subr.mxu0 0.0
    %203 = vmatpush2.msra.mxu0 0.0
    %204 = vmatprep.subr.mxu0 0.0
    %205 = vmatpush2.msra.mxu0 0.0
    %206 = vmatprep.subr.mxu0 0.0
    %207 = vmatpush2.msra.mxu0 0.0
    %208 = vmatprep.subr.mxu0 0.0
    %209 = vmatpush2.msra.mxu0 0.0
    %210 = vmatprep.subr.mxu0 0.0
    %211 = vmatpush2.msra.mxu0 0.0
    %212 = vmatprep.subr.mxu0 0.0
    %213 = vmatpush2.msra.mxu0 0.0
    %214 = vmatprep.subr.mxu0 0.0
    %215 = vmatpush2.msra.mxu0 0.0
    %216 = vmatprep.subr.mxu0 0.0
    %217 = vmatpush2.msra.mxu0 0.0
    %218 = vmatprep.subr.mxu0 0.0
    %219 = vmatpush2.msra.mxu0 0.0
    %220 = vmatprep.subr.mxu0 0.0
    %221 = vmatpush2.msra.mxu0 0.0
    %222 = vmatprep.mubr.f32.mxu0 0.0
    %223 = vmatmul.mubr.f32.gmra.mxu0 %v156
    %v224 = vpop.f32.mrf.mxu0
    %v225 = vadd.f32 %v153, %v224
    %v226 = vpop.f32.mrf.mxu0
    %227 = vdwg.mxu0
    %v228 = vmax.f32 %v225, 0.0
    %vm229 = vcmask 130048
    %230 = vst.msk [vmem:[#allocation7] sm:$0xff] %vm229, %v228
    %s231 = scalar_lea.vmem %s0, 8
    %v232 = vld [vmem:[%s231] sm:$0xff]
    %234 = vrot.lane.b32.xlu0 %v232, 1
    %v235 = vpop.permute.xlu0 %234
    %v237 = vsel %vm54, 0.0, %v235
    %238 = vrot.lane.b32.xlu0 %v232, 127
    %v239 = vpop.permute.xlu0 %238
    %v241 = vsel %vm59, %v239, 0.0
    %242 = vmatprep.subr.mxu0 0.0
    %243 = vmatpush1.msra.mxu0 0.0
    %244 = vmatprep.subr.mxu0 0.0
    %245 = vmatpush1.msra.mxu0 0.0
    %246 = vmatprep.subr.mxu0 0.0
    %247 = vmatpush1.msra.mxu0 0.0
    %248 = vmatprep.subr.mxu0 0.0
    %249 = vmatpush1.msra.mxu0 0.0
    %250 = vmatprep.subr.mxu0 0.0
    %251 = vmatpush1.msra.mxu0 0.0
    %252 = vmatprep.subr.mxu0 0.0
    %253 = vmatpush1.msra.mxu0 0.0
    %254 = vmatprep.subr.mxu0 0.0
    %255 = vmatpush1.msra.mxu0 0.0
    %256 = vmatprep.subr.mxu0 0.0
    %257 = vmatpush1.msra.mxu0 0.0
    %258 = vmatprep.subr.mxu0 0.0
    %259 = vmatpush1.msra.mxu0 0.0
    %260 = vmatprep.subr.mxu0 0.0
    %261 = vmatpush1.msra.mxu0 0.0
    %262 = vmatprep.subr.mxu0 0.0
    %263 = vmatpush1.msra.mxu0 0.0
    %264 = vmatprep.subr.mxu0 0.0
    %265 = vmatpush1.msra.mxu0 0.0
    %266 = vmatprep.subr.mxu0 0.0
    %267 = vmatpush1.msra.mxu0 0.0
    %268 = vmatprep.subr.mxu0 0.0
    %269 = vmatpush1.msra.mxu0 %v241
    %270 = vmatprep.subr.mxu0 0.0
    %271 = vmatpush1.msra.mxu0 %v232
    %272 = vmatprep.subr.mxu0 0.0
    %273 = vmatpush1.msra.mxu0 %v237
    %274 = vmatprep.subr.mxu0 0.0
    %275 = vmatpush2.msra.mxu0 0.0
    %276 = vmatprep.subr.mxu0 0.0
    %277 = vmatpush2.msra.mxu0 0.0
    %278 = vmatprep.subr.mxu0 0.0
    %279 = vmatpush2.msra.mxu0 0.0
    %280 = vmatprep.subr.mxu0 0.0
    %281 = vmatpush2.msra.mxu0 0.0
    %282 = vmatprep.subr.mxu0 0.0
    %283 = vmatpush2.msra.mxu0 0.0
    %284 = vmatprep.subr.mxu0 0.0
    %285 = vmatpush2.msra.mxu0 0.0
    %286 = vmatprep.subr.mxu0 0.0
    %287 = vmatpush2.msra.mxu0 0.0
    %288 = vmatprep.subr.mxu0 0.0
    %289 = vmatpush2.msra.mxu0 0.0
    %290 = vmatprep.subr.mxu0 0.0
    %291 = vmatpush2.msra.mxu0 0.0
    %292 = vmatprep.subr.mxu0 0.0
    %293 = vmatpush2.msra.mxu0 0.0
    %294 = vmatprep.subr.mxu0 0.0
    %295 = vmatpush2.msra.mxu0 0.0
    %296 = vmatprep.subr.mxu0 0.0
    %297 = vmatpush2.msra.mxu0 0.0
    %298 = vmatprep.subr.mxu0 0.0
    %299 = vmatpush2.msra.mxu0 0.0
    %300 = vmatprep.subr.mxu0 0.0
    %301 = vmatpush2.msra.mxu0 0.0
    %302 = vmatprep.subr.mxu0 0.0
    %303 = vmatpush2.msra.mxu0 0.0
    %304 = vmatprep.subr.mxu0 0.0
    %305 = vmatpush2.msra.mxu0 0.0
    %306 = vmatprep.mubr.f32.mxu0 0.0
    %307 = vmatmul.mubr.f32.gmra.mxu0 %v68
    %v308 = vpop.f32.mrf.mxu0
    %v309 = vadd.f32 %v64, %v308
    %v310 = vpop.f32.mrf.mxu0
    %311 = vdwg.mxu0
    %v312 = vmax.f32 %v309, 0.0
    %314 = vrot.lane.b32.xlu0 %v312, 1
    %v315 = vpop.permute.xlu0 %314
    %v317 = vsel %vm54, 0.0, %v315
    %318 = vrot.lane.b32.xlu0 %v312, 127
    %v319 = vpop.permute.xlu0 %318
    %v321 = vsel %vm59, %v319, 0.0
    %322 = vmatprep.subr.mxu0 0.0
    %323 = vmatpush1.msra.mxu0 0.0
    %324 = vmatprep.subr.mxu0 0.0
    %325 = vmatpush1.msra.mxu0 0.0
    %326 = vmatprep.subr.mxu0 0.0
    %327 = vmatpush1.msra.mxu0 0.0
    %328 = vmatprep.subr.mxu0 0.0
    %329 = vmatpush1.msra.mxu0 0.0
    %330 = vmatprep.subr.mxu0 0.0
    %331 = vmatpush1.msra.mxu0 0.0
    %332 = vmatprep.subr.mxu0 0.0
    %333 = vmatpush1.msra.mxu0 0.0
    %334 = vmatprep.subr.mxu0 0.0
    %335 = vmatpush1.msra.mxu0 0.0
    %336 = vmatprep.subr.mxu0 0.0
    %337 = vmatpush1.msra.mxu0 0.0
    %338 = vmatprep.subr.mxu0 0.0
    %339 = vmatpush1.msra.mxu0 0.0
    %340 = vmatprep.subr.mxu0 0.0
    %341 = vmatpush1.msra.mxu0 0.0
    %342 = vmatprep.subr.mxu0 0.0
    %343 = vmatpush1.msra.mxu0 0.0
    %344 = vmatprep.subr.mxu0 0.0
    %345 = vmatpush1.msra.mxu0 0.0
    %346 = vmatprep.subr.mxu0 0.0
    %347 = vmatpush1.msra.mxu0 0.0
    %348 = vmatprep.subr.mxu0 0.0
    %349 = vmatpush1.msra.mxu0 %v321
    %350 = vmatprep.subr.mxu0 0.0
    %351 = vmatpush1.msra.mxu0 %v312
    %352 = vmatprep.subr.mxu0 0.0
    %353 = vmatpush1.msra.mxu0 %v317
    %354 = vmatprep.subr.mxu0 0.0
    %355 = vmatpush2.msra.mxu0 0.0
    %356 = vmatprep.subr.mxu0 0.0
    %357 = vmatpush2.msra.mxu0 0.0
    %358 = vmatprep.subr.mxu0 0.0
    %359 = vmatpush2.msra.mxu0 0.0
    %360 = vmatprep.subr.mxu0 0.0
    %361 = vmatpush2.msra.mxu0 0.0
    %362 = vmatprep.subr.mxu0 0.0
    %363 = vmatpush2.msra.mxu0 0.0
    %364 = vmatprep.subr.mxu0 0.0
    %365 = vmatpush2.msra.mxu0 0.0
    %366 = vmatprep.subr.mxu0 0.0
    %367 = vmatpush2.msra.mxu0 0.0
    %368 = vmatprep.subr.mxu0 0.0
    %369 = vmatpush2.msra.mxu0 0.0
    %370 = vmatprep.subr.mxu0 0.0
    %371 = vmatpush2.msra.mxu0 0.0
    %372 = vmatprep.subr.mxu0 0.0
    %373 = vmatpush2.msra.mxu0 0.0
    %374 = vmatprep.subr.mxu0 0.0
    %375 = vmatpush2.msra.mxu0 0.0
    %376 = vmatprep.subr.mxu0 0.0
    %377 = vmatpush2.msra.mxu0 0.0
    %378 = vmatprep.subr.mxu0 0.0
    %379 = vmatpush2.msra.mxu0 0.0
    %380 = vmatprep.subr.mxu0 0.0
    %381 = vmatpush2.msra.mxu0 0.0
    %382 = vmatprep.subr.mxu0 0.0
    %383 = vmatpush2.msra.mxu0 0.0
    %384 = vmatprep.subr.mxu0 0.0
    %385 = vmatpush2.msra.mxu0 0.0
    %386 = vmatprep.mubr.f32.mxu0 0.0
    %387 = vmatmul.mubr.f32.gmra.mxu0 %v156
    %v388 = vpop.f32.mrf.mxu0
    %v389 = vadd.f32 %v153, %v388
    %v390 = vpop.f32.mrf.mxu0
    %391 = vdwg.mxu0
    %v392 = vmax.f32 %v389, 0.0
    %s393 = scalar_lea.vmem [#allocation7], 8
    %394 = vst.msk [vmem:[%s393] sm:$0xff] %vm229, %v392
    // Predicated region
    $region30: #{tpu_custom_call.1} parent=1 // pred_check
      _
    $region31: #{tpu_custom_call.1} parent=1 // pred_check_branch
      %396 = sbr.rel (0) target = $region33
    $region32: #{tpu_custom_call.1} parent=1 // pred_region
      %s398 = ssub.s32 256, 256
      %399 = vsyncadd [#allocation4], %s398
      %s400 = sshll.u32 [#allocation7], 4
      %s401 = int_to_ptr.vmem [resolvable:$true] %s400
      %406 = dma.vmem_to_hbm [thread:$0]  %s401, 256, %s5, [#allocation4], 128, 128, 8
    $region33: #{tpu_custom_call.1} parent=1 // pred_fallthru
      _
    // Predicated region
    $region34: #{tpu_custom_call.1} parent=1 // pred_check
      _
    $region35: #{tpu_custom_call.1} parent=1 // pred_check_branch
      %408 = sbr.rel (0) target = $region37
    $region36: #{tpu_custom_call.1} parent=1 // pred_region
      %409 = dma.done [#allocation4], 256
    $region37: #{tpu_custom_call.1} parent=1 // pred_fallthru
      _
    %410 = vsyncpa [#allocation3], 1
    %411 = vsyncpa [#allocation6], 1
    %412 = vsyncpa [#allocation4], 1

</llo_original>
